<compile_context>
chip_gen: v7x
topology: tpu7x:2x2x1
jax: 0.10.0
libtpu: 0.0.40
codegen_flags: <defaults>
</compile_context>

<pallas_src>
import functools

import jax
import jax.numpy as jnp
from jax import lax
from jax.experimental import pallas as pl
from jax.experimental.pallas import tpu as pltpu


def _sublane_pack(dtype) -> int:
    """Minimum second-to-last-dim multiple for a packed TPU tile."""
    size = jnp.dtype(dtype).itemsize
    if size >= 4:
        return 8
    if size == 2:
        return 16
    return 32


def _chip_info():
    """Generation-specific tuning knobs (best effort; safe defaults)."""
    try:
        kind = jax.devices()[0].device_kind.lower()
    except Exception:
        kind = ""
    if "v7" in kind:
        # 64 MiB physical VMEM per TC, 2 TCs/chip, ~3.2 TB/s HBM.
        return {"vmem_cap": 48 << 20, "block_bytes": 2 << 20, "multi_tc": True}
    if "v6" in kind or "v5" in kind:
        # 128 MiB physical VMEM, 1 TC/chip.
        return {"vmem_cap": 64 << 20, "block_bytes": 4 << 20, "multi_tc": False}
    # Unknown generation: conservative.
    return {"vmem_cap": 32 << 20, "block_bytes": 2 << 20, "multi_tc": False}


def _est_vmem(tile_rows, tile_cols, itemsize):
    """in + out (double-buffered) + ~4 live f32 temporaries + headroom."""
    io = 2 * 2 * tile_rows * tile_cols * itemsize
    temps = 4 * tile_rows * tile_cols * 4
    return io + temps + (2 << 20)


# --------------------------------------------------------------------------
# Single-pass kernel: whole H*W row per block.
# --------------------------------------------------------------------------
def _simam_kernel(x_ref, o_ref, *, hw, e_lambda):
    """One block: (tile_rows, hw). Each row is an independent (b, c) plane."""
    x = x_ref[...].astype(jnp.float32)
    inv_hw = 1.0 / float(hw)
    inv_n = 1.0 / float(max(hw - 1, 1))  # guard hw == 1

    # Fused one-pass moments: both lane (XLU) reductions issue back-to-back.
    sum_x = jnp.sum(x, axis=-1, keepdims=True)
    sum_x2 = jnp.sum(x * x, axis=-1, keepdims=True)
    mu = sum_x * inv_hw
    # sum((x - mu)^2) = sum(x^2) - hw * mu^2 ; clamp guards f32 cancellation.
    s = jnp.maximum(sum_x2 - sum_x * mu, 0.0)

    # Per-row column (tile_rows, 1): exact divide is essentially free here.
    inv_denom = 1.0 / (4.0 * (s * inv_n + e_lambda))
    y = (x - mu) ** 2 * inv_denom + 0.5
    # sigmoid(y) = 0.5 * tanh(0.5 * y) + 0.5 : one EUP op instead of exp+recip.
    o_ref[...] = (x * (0.5 * jnp.tanh(0.5 * y) + 0.5)).astype(o_ref.dtype)


def _simam_rowwise(x2d, hw, e_lambda, info):
    rows = x2d.shape[0]
    dtype = x2d.dtype
    itemsize = jnp.dtype(dtype).itemsize
    pack = _sublane_pack(dtype)
    row_bytes = hw * itemsize
    rows_up = pl.cdiv(rows, pack) * pack

    # Big row tiles to amortize the ~0.35 us/grid-step overhead.
    tile_rows = max(pack, (info["block_bytes"] // row_bytes) // pack * pack)
    tile_rows = min(tile_rows, rows_up)

    # On multi-TC chips (v7x) keep a balanced, even grid so both cores run.
    if info["multi_tc"] and rows_up >= 2 * pack:
        nblk = max(2, pl.cdiv(rows_up, tile_rows))
        if nblk % 2:
            nblk += 1
        tile_rows = max(pack, pl.cdiv(pl.cdiv(rows_up, nblk), pack) * pack)

    vmem_limit = min(info["vmem_cap"],
                     max(32 << 20, _est_vmem(tile_rows, hw, itemsize)))

    grid = (pl.cdiv(rows, tile_rows),)
    kernel = functools.partial(_simam_kernel, hw=hw, e_lambda=float(e_lambda))
    return pl.pallas_call(
        kernel,
        out_shape=jax.ShapeDtypeStruct((rows, hw), dtype),
        grid_spec=pltpu.PrefetchScalarGridSpec(
            num_scalar_prefetch=0,
            grid=grid,
            # Last block dim == full hw -> exempt from the 128 rule; ragged
            # last row block is fine (rows are independent, stores masked).
            in_specs=[pl.BlockSpec((tile_rows, hw), lambda i: (i, 0))],
            out_specs=pl.BlockSpec((tile_rows, hw), lambda i: (i, 0)),
        ),
        compiler_params=pltpu.CompilerParams(
            dimension_semantics=("parallel",),
            vmem_limit_bytes=vmem_limit,
        ),
    )(x2d)


# --------------------------------------------------------------------------
# Fallback: column-tiled two-pass variant for planes too big for VMEM.
# --------------------------------------------------------------------------
def _stats_kernel(x_ref, sx_ref, sx2_ref, *, hw, tile_cols):
    j = pl.program_id(1)

    @pl.when(j == 0)
    def _():
        sx_ref[...] = jnp.zeros_like(sx_ref)
        sx2_ref[...] = jnp.zeros_like(sx2_ref)

    x = x_ref[...].astype(jnp.float32)
    if hw % tile_cols != 0:
        # Mask out-of-range lanes of the ragged last column block.
        lane = lax.broadcasted_iota(jnp.int32, x.shape, dimension=1)
        x = jnp.where(j * tile_cols + lane < hw, x, 0.0)
    sx_ref[...] += jnp.sum(x, axis=-1, keepdims=True)
    sx2_ref[...] += jnp.sum(x * x, axis=-1, keepdims=True)


def _apply_kernel(x_ref, sx_ref, sx2_ref, o_ref, *, hw, e_lambda):
    x = x_ref[...].astype(jnp.float32)
    inv_hw = 1.0 / float(hw)
    inv_n = 1.0 / float(max(hw - 1, 1))
    sx = sx_ref[...]
    mu = sx * inv_hw
    s = jnp.maximum(sx2_ref[...] - sx * mu, 0.0)
    inv_denom = 1.0 / (4.0 * (s * inv_n + e_lambda))
    y = (x - mu) ** 2 * inv_denom + 0.5
    o_ref[...] = (x * (0.5 * jnp.tanh(0.5 * y) + 0.5)).astype(o_ref.dtype)


def _simam_col_tiled(x2d, hw, e_lambda, info, col_tile=None):
    rows = x2d.shape[0]
    dtype = x2d.dtype
    itemsize = jnp.dtype(dtype).itemsize
    pack = _sublane_pack(dtype)

    tile_rows = pack  # rows are huge per-plane on this path; keep row dim minimal
    if col_tile is None:
        col_tile = (info["block_bytes"] // max(1, tile_rows * itemsize)) // 128 * 128
    if col_tile >= hw or col_tile < 128 or hw < 128:
        col_tile = hw  # full-extent block (exempt from the 128 rule)
    else:
        col_tile = col_tile // 128 * 128

    row_blocks = pl.cdiv(rows, tile_rows)
    col_blocks = pl.cdiv(hw, col_tile)
    vmem_limit = min(info["vmem_cap"],
                     max(32 << 20, _est_vmem(tile_rows, col_tile, itemsize)))

    # Pass 1: per-row sum(x), sum(x^2) accumulated across the column axis.
    stats_kernel = functools.partial(_stats_kernel, hw=hw, tile_cols=col_tile)
    sum_x, sum_x2 = pl.pallas_call(
        stats_kernel,
        out_shape=(jax.ShapeDtypeStruct((rows, 1), jnp.float32),
                   jax.ShapeDtypeStruct((rows, 1), jnp.float32)),
        grid_spec=pltpu.PrefetchScalarGridSpec(
            num_scalar_prefetch=0,
            grid=(row_blocks, col_blocks),
            in_specs=[pl.BlockSpec((tile_rows, col_tile), lambda i, j: (i, j))],
            out_specs=[pl.BlockSpec((tile_rows, 1), lambda i, j: (i, 0)),
                       pl.BlockSpec((tile_rows, 1), lambda i, j: (i, 0))],
        ),
        compiler_params=pltpu.CompilerParams(
            dimension_semantics=("parallel", "arbitrary"),
            vmem_limit_bytes=vmem_limit,
        ),
    )(x2d)

    # Pass 2: apply the attention with the precomputed row statistics.
    apply_kernel = functools.partial(_apply_kernel, hw=hw, e_lambda=float(e_lambda))
    return pl.pallas_call(
        apply_kernel,
        out_shape=jax.ShapeDtypeStruct((rows, hw), dtype),
        grid_spec=pltpu.PrefetchScalarGridSpec(
            num_scalar_prefetch=0,
            grid=(row_blocks, col_blocks),
            in_specs=[pl.BlockSpec((tile_rows, col_tile), lambda i, j: (i, j)),
                      pl.BlockSpec((tile_rows, 1), lambda i, j: (i, 0)),
                      pl.BlockSpec((tile_rows, 1), lambda i, j: (i, 0))],
            out_specs=pl.BlockSpec((tile_rows, col_tile), lambda i, j: (i, j)),
        ),
        compiler_params=pltpu.CompilerParams(
            dimension_semantics=("parallel", "parallel"),
            vmem_limit_bytes=vmem_limit,
        ),
    )(x2d, sum_x, sum_x2)


# --------------------------------------------------------------------------
# Public wrapper.
# --------------------------------------------------------------------------
def simam(x, e_lambda: float = 1e-4, *, force_col_tiled: bool = False,
          col_tile: int | None = None):
    """SimAM forward. x: (B, C, H, W)."""
    b, c, h, w = x.shape
    hw = h * w
    rows = b * c
    x2d = x.reshape(rows, hw)

    info = _chip_info()
    itemsize = jnp.dtype(x.dtype).itemsize
    pack = _sublane_pack(x.dtype)

    # If even a minimum-row block (plus f32 temporaries) would blow the scoped
    # VMEM budget, use the column-tiled two-pass fallback.
    if force_col_tiled or _est_vmem(pack, hw, itemsize) > info["vmem_cap"]:
        out2d = _simam_col_tiled(x2d, hw, float(e_lambda), info, col_tile=col_tile)
    else:
        out2d = _simam_rowwise(x2d, hw, float(e_lambda), info)
    return out2d.reshape(b, c, h, w)


def _simam_ref(x, e_lambda: float = 1e-4):
    """Pure-JAX reference matching the PyTorch forward exactly."""
    b, c, h, w = x.shape
    n = w * h - 1
    mu = jnp.mean(x, axis=(2, 3), keepdims=True)
    d = (x - mu) ** 2
    y = d / (4 * (jnp.sum(d, axis=(2, 3), keepdims=True) / n + e_lambda)) + 0.5
    return x * jax.nn.sigmoid(y)


if __name__ == "__main__":
    key = jax.random.PRNGKey(0)
    k0, k1, k2 = jax.random.split(key, 3)

    # main case: B=2, C=4, H=W=16 (H*W = 256, lane-dense)
    x = jax.random.normal(k0, (2, 4, 16, 16), dtype=jnp.float32)
    out = jax.block_until_ready(simam(x, e_lambda=1e-4))
    ref = _simam_ref(x, e_lambda=1e-4)
    assert out.shape == x.shape and out.dtype == x.dtype
    assert jnp.allclose(out, ref, atol=1e-4, rtol=1e-4), "mismatch vs reference"

    # ragged-lane case: H*W = 49 (no wrapper pad/slice, full-dim lane block)
    x2 = jax.random.normal(k1, (2, 4, 7, 7), dtype=jnp.float32)
    out2 = jax.block_until_ready(simam(x2, e_lambda=1e-4))
    ref2 = _simam_ref(x2, e_lambda=1e-4)
    assert jnp.allclose(out2, ref2, atol=1e-4, rtol=1e-4), "mismatch (ragged lanes)"

    # ragged-row case: B*C = 15 with 8-row tiles exercises masked row stores
    x3 = jax.random.normal(k2, (3, 5, 8, 8), dtype=jnp.float32)
    out3 = jax.block_until_ready(simam(x3, e_lambda=1e-4))
    ref3 = _simam_ref(x3, e_lambda=1e-4)
    assert jnp.allclose(out3, ref3, atol=1e-4, rtol=1e-4), "mismatch (ragged rows)"

    # large-plane fallback path, forced at small shape (2 column blocks)
    out4 = jax.block_until_ready(simam(x, e_lambda=1e-4,
                                       force_col_tiled=True, col_tile=128))
    assert jnp.allclose(out4, ref, atol=1e-4, rtol=1e-4), "mismatch (col-tiled)"

    print("KERNEL_OK")
</pallas_src>

<mosaic_0001>
module attributes {stable_mosaic.version = 11 : i64} {
  func.func @_simam_kernel(%arg0: i32, %arg1: memref<8x256xf32, #tpu.memory_space<vmem>>, %arg2: memref<8x256xf32, #tpu.memory_space<vmem>>) attributes {dimension_semantics = [#tpu.dimension_semantics<parallel>], iteration_bounds = array<i64: 1>, scalar_prefetch = 0 : i64, scratch_operands = 0 : i64, tpu.core_type = #tpu.core_type<tc>, window_params = [{transform_indices = @transform_0, window_bounds = array<i64: 8, 256>}, {transform_indices = @transform_1, window_bounds = array<i64: 8, 256>}]} {
    %c0 = arith.constant 0 : index
    %c0_0 = arith.constant 0 : index
    %0 = vector.load %arg1[%c0, %c0_0] : memref<8x256xf32, #tpu.memory_space<vmem>>, vector<8x256xf32>
    %cst = arith.constant dense<0.000000e+00> : vector<8xf32>
    %1 = vector.multi_reduction <add>, %0, %cst [1] : vector<8x256xf32> to vector<8xf32>
    %2 = vector.shape_cast %1 : vector<8xf32> to vector<8x1xf32>
    %3 = arith.mulf %0, %0 : vector<8x256xf32>
    %cst_1 = arith.constant dense<0.000000e+00> : vector<8xf32>
    %4 = vector.multi_reduction <add>, %3, %cst_1 [1] : vector<8x256xf32> to vector<8xf32>
    %5 = vector.shape_cast %4 : vector<8xf32> to vector<8x1xf32>
    %cst_2 = arith.constant 3.906250e-03 : f32
    %6 = vector.broadcast %cst_2 : f32 to vector<8x1xf32>
    %7 = arith.mulf %2, %6 : vector<8x1xf32>
    %8 = arith.mulf %2, %7 : vector<8x1xf32>
    %9 = arith.subf %5, %8 : vector<8x1xf32>
    %cst_3 = arith.constant 0.000000e+00 : f32
    %10 = vector.broadcast %cst_3 : f32 to vector<8x1xf32>
    %11 = arith.maximumf %9, %10 : vector<8x1xf32>
    %cst_4 = arith.constant 0.00392156886 : f32
    %12 = vector.broadcast %cst_4 : f32 to vector<8x1xf32>
    %13 = arith.mulf %11, %12 : vector<8x1xf32>
    %cst_5 = arith.constant 9.99999974E-5 : f32
    %14 = vector.broadcast %cst_5 : f32 to vector<8x1xf32>
    %15 = arith.addf %13, %14 : vector<8x1xf32>
    %cst_6 = arith.constant 4.000000e+00 : f32
    %16 = vector.broadcast %cst_6 : f32 to vector<8x1xf32>
    %17 = arith.mulf %16, %15 : vector<8x1xf32>
    %cst_7 = arith.constant 1.000000e+00 : f32
    %18 = vector.broadcast %cst_7 : f32 to vector<8x1xf32>
    %19 = arith.divf %18, %17 : vector<8x1xf32>
    %20 = vector.broadcast %7 : vector<8x1xf32> to vector<8x256xf32>
    %21 = arith.subf %0, %20 : vector<8x256xf32>
    %22 = arith.mulf %21, %21 : vector<8x256xf32>
    %23 = vector.broadcast %19 : vector<8x1xf32> to vector<8x256xf32>
    %24 = arith.mulf %22, %23 : vector<8x256xf32>
    %cst_8 = arith.constant 5.000000e-01 : f32
    %25 = vector.broadcast %cst_8 : f32 to vector<8x256xf32>
    %26 = arith.addf %24, %25 : vector<8x256xf32>
    %cst_9 = arith.constant 5.000000e-01 : f32
    %27 = vector.broadcast %cst_9 : f32 to vector<8x256xf32>
    %28 = arith.mulf %27, %26 : vector<8x256xf32>
    %29 = math.tanh %28 : vector<8x256xf32>
    %cst_10 = arith.constant 5.000000e-01 : f32
    %30 = vector.broadcast %cst_10 : f32 to vector<8x256xf32>
    %31 = arith.mulf %30, %29 : vector<8x256xf32>
    %cst_11 = arith.constant 5.000000e-01 : f32
    %32 = vector.broadcast %cst_11 : f32 to vector<8x256xf32>
    %33 = arith.addf %31, %32 : vector<8x256xf32>
    %34 = arith.mulf %0, %33 : vector<8x256xf32>
    %c0_12 = arith.constant 0 : index
    %c0_13 = arith.constant 0 : index
    %35 = vector.load %arg2[%c0_12, %c0_13] : memref<8x256xf32, #tpu.memory_space<vmem>>, vector<8x256xf32>
    tpu.vector_store %arg2[%c0_12, %c0_13], %34 {strides = array<i32>} : memref<8x256xf32, #tpu.memory_space<vmem>>, vector<8x256xf32>,
    return
  }
  func.func @transform_0(%arg0: i32) -> (i32, i32) {
    %c0_i32 = arith.constant 0 : i32
    %c0_i32_0 = arith.constant 0 : i32
    return %arg0, %c0_i32 : i32, i32
  }
  func.func @transform_1(%arg0: i32) -> (i32, i32) {
    %c0_i32 = arith.constant 0 : i32
    %c0_i32_0 = arith.constant 0 : i32
    return %arg0, %c0_i32 : i32, i32
  }
}

</mosaic_0001>

<llo_original>
// kernel: tpu_custom_call.1
$region0: #{tpu_custom_call.1}
  #allocation0 [shape = 'u32[]', space=smem, size = 0x4, offset = 0x4, fixed_abs, tag = 'smem constant byte address 0x4 - core index']
  #allocation1 [shape = 'u32[144,128]{1,0:T(1,128)}', space=vmem, size = 0x12000, scoped, tag = 'internal scratch']
  %s0 = inlined_call_operand.hbm [shape: f32[8,256], index: 0, kind: input, shape index: {}]
  %s1 = inlined_call_operand.hbm [shape: f32[8,256], index: 1, kind: output, shape index: {}]
  %s2 = sld [smem:[#allocation0]]
  $region18: #{tpu_custom_call.1} parent=0
    _
  %s4 = ssub.s32 1, %s2
  %s5 = scalar_select 0, %s4, %s2
  $region1: #{tpu_custom_call.1} parent=0
    #allocation2 [shape = 'u8[8192]{0}', space=vmem, size = 0x2000, scoped, tag = 'input window, operand 0, single buffered']
    #allocation3 [shape = 's32[1]{0}', space=sflag, size = 0x4, scoped, tag = 'scoped memory for tpu_custom_call.1']
    #allocation4 [shape = 's32[1]{0}', space=sflag, size = 0x4, scoped, tag = 'scoped memory for tpu_custom_call.1']
    #allocation5 [shape = 'u8[8192]{0}', space=vmem, size = 0x2000, scoped, tag = 'output window, operand 0, single buffered']
    %6 = vsyncpa [#allocation3], 0
    %7 = vsyncpa [#allocation4], 0
    // Predicated region
    $region2: #{tpu_custom_call.1} parent=1 // pred_check
      _
    $region3: #{tpu_custom_call.1} parent=1 // pred_check_branch
      %9 = sbr.rel (0) target = $region5
    $region4: #{tpu_custom_call.1} parent=1 // pred_region
      %s11 = ssub.s32 256, 256
      %12 = vsyncadd [#allocation3], %s11
      %s14 = sshll.u32 [#allocation2], 4
      %s15 = int_to_ptr.vmem [resolvable:$true] %s14
      %17 = dma.hbm_to_vmem [thread:$0]  %s0, 256, %s15, [#allocation3]
    $region5: #{tpu_custom_call.1} parent=1 // pred_fallthru
      _
    // Predicated region
    $region6: #{tpu_custom_call.1} parent=1 // pred_check
      _
    $region7: #{tpu_custom_call.1} parent=1 // pred_check_branch
      %19 = sbr.rel (0) target = $region9
    $region8: #{tpu_custom_call.1} parent=1 // pred_region
      %20 = dma.done [#allocation3], 256
    $region9: #{tpu_custom_call.1} parent=1 // pred_fallthru
      _
    %v21 = vld [vmem:[#allocation2] sm:$0xff]
    %v22 = vld [vmem:[#allocation2 + $0x8] sm:$0xff]
    %v23 = vadd.f32 %v21, %v22
    %24 = vadd.xlane.f32.xlu0 %v23
    %v25 = vpop.xlane.xlu0 %24
    %v26 = vmul.f32 %v21, %v21
    %v27 = vmul.f32 %v22, %v22
    %v28 = vadd.f32 %v26, %v27
    %29 = vadd.xlane.f32.xlu0 %v28
    %v30 = vpop.xlane.xlu0 %29
    %v31 = vmul.f32 %v25, 0.00390625
    %v32 = vmul.f32 %v25, %v31
    %v33 = vsub.f32 %v30, %v32
    %v34 = vmax.f32 %v33, 0.0
    %v35 = vmul.f32 %v34, 0.003921569
    %v36 = vadd.f32 %v35, 0.0001
    %v37 = vmul.f32 %v36, 4.0
    %v38 = vrcp.pop %v37
    %v39 = vmul.f32 1.0, %v38
    %v40 = vsub.f32 %v21, %v31
    %v41 = vsub.f32 %v22, %v31
    %v42 = vmul.f32 %v40, %v40
    %v43 = vmul.f32 %v41, %v41
    %v44 = vmul.f32 %v42, %v39
    %v45 = vmul.f32 %v43, %v39
    %v46 = vadd.f32 %v44, 0.5
    %v47 = vadd.f32 %v45, 0.5
    %v48 = vmul.f32 %v46, 0.5
    %v49 = vmul.f32 %v47, 0.5
    %v50 = vtanh.pop %v48
    %v51 = vtanh.pop %v49
    %v52 = vmul.f32 %v50, 0.5
    %v53 = vmul.f32 %v51, 0.5
    %v54 = vadd.f32 %v52, 0.5
    %v55 = vadd.f32 %v53, 0.5
    %v56 = vmul.f32 %v21, %v54
    %v57 = vmul.f32 %v22, %v55
    %58 = vst [vmem:[#allocation5] sm:$0xff] %v56
    %59 = vst [vmem:[#allocation5 + $0x8] sm:$0xff] %v57
    // Predicated region
    $region10: #{tpu_custom_call.1} parent=1 // pred_check
      _
    $region11: #{tpu_custom_call.1} parent=1 // pred_check_branch
      %61 = sbr.rel (0) target = $region13
    $region12: #{tpu_custom_call.1} parent=1 // pred_region
      %s63 = ssub.s32 256, 256
      %64 = vsyncadd [#allocation4], %s63
      %s66 = sshll.u32 [#allocation5], 4
      %s67 = int_to_ptr.vmem [resolvable:$true] %s66
      %69 = dma.vmem_to_hbm [thread:$0]  %s67, 256, %s1, [#allocation4]
    $region13: #{tpu_custom_call.1} parent=1 // pred_fallthru
      _
    // Predicated region
    $region14: #{tpu_custom_call.1} parent=1 // pred_check
      _
    $region15: #{tpu_custom_call.1} parent=1 // pred_check_branch
      %71 = sbr.rel (0) target = $region17
    $region16: #{tpu_custom_call.1} parent=1 // pred_region
      %72 = dma.done [#allocation4], 256
    $region17: #{tpu_custom_call.1} parent=1 // pred_fallthru
      _
    %73 = vsyncpa [#allocation3], 1
    %74 = vsyncpa [#allocation4], 1

</llo_original>
